<compile_context>
chip_gen: v5e
topology: v5e:2x2
jax: 0.10.0
libtpu: 0.0.40
codegen_flags: <defaults>
</compile_context>

<pallas_src>
import functools
import math

import jax
import jax.numpy as jnp
from jax.experimental import pallas as pl
from jax.experimental.pallas import tpu as pltpu

NPOSE = 24 * 6          # 144
NSHAPE = 10
NCAM = 3
NSTATE = NPOSE + NSHAPE + NCAM      # 157
STATE_PAD = 256                     # lane-dense padded state width
IMG_FEAT = 2048                     # 512 * 4 (Bottleneck expansion)
FC_FEAT = 1024
N_ITER = 3

CONV_K = 7
CONV_S = 2
CONV_P = 3
CIN = 3
K2C = CONV_K * CONV_K * CIN         # 147 (im2col K dim)
ENC_CH = 64                         # real conv1 output channels
ENC_SLAB = 128                      # lane-dense channel slab (zeros above 64)


# ---------------------------------------------------------------------------
# Kernel 1: encoder  (im2col conv1 + folded BN + ReLU + masked GAP + proj)
# grid = (batch ["parallel"], patch-row tiles ["arbitrary"])
# ---------------------------------------------------------------------------
def _encoder_kernel(patches_ref, wconv_ref, bconv_ref, wproj_ref, bproj_ref,
                    out_ref, pooled_ref, *, hw):
    r = pl.program_id(1)

    @pl.when(r == 0)
    def _():
        pooled_ref[...] = jnp.zeros_like(pooled_ref)

    # conv1 (BN folded) as one bf16 MXU matmul on this image's patch tile.
    h = jnp.dot(patches_ref[0], wconv_ref[...],
                preferred_element_type=jnp.float32) + bconv_ref[...]
    h = jnp.maximum(h, 0.0)                                   # ReLU

    # Global average pool as a masked row-sum (VPU/XLU, free under the MXU).
    # Padded im2col rows evaluate to ReLU(bias) != 0, so mask them explicitly.
    row_tile = h.shape[0]
    row_idx = jax.lax.broadcasted_iota(jnp.int32, h.shape, 0) + r * row_tile
    h = jnp.where(row_idx < hw, h, 0.0)
    pooled_ref[...] += jnp.sum(h, axis=0, keepdims=True)

    @pl.when(r == pl.num_programs(1) - 1)
    def _():
        # Stand-in projection to the 2048-d image feature (bf16 weights).
        feat = (pooled_ref[...] * (1.0 / hw))[:, :ENC_CH].astype(jnp.bfloat16)
        out_ref[0] = (jnp.dot(feat, wproj_ref[...],
                              preferred_element_type=jnp.float32)
                      + bproj_ref[...]).astype(out_ref.dtype)


def encode(params, x_nchw, row_tile=512):
    B, C, H, W = x_nchw.shape
    assert C == CIN
    x = jnp.transpose(x_nchw, (0, 2, 3, 1))                   # NCHW -> NHWC
    xp = jnp.pad(x, ((0, 0), (CONV_P, CONV_P), (CONV_P, CONV_P), (0, 0)))
    H1 = (H + 2 * CONV_P - CONV_K) // CONV_S + 1
    W1 = (W + 2 * CONV_P - CONV_K) // CONV_S + 1
    hw = H1 * W1

    # im2col in the wrapper: (B, H1*W1, 49*Cin) patch tensor, cast to bf16.
    taps = []
    for dy in range(CONV_K):
        for dx in range(CONV_K):
            taps.append(xp[:, dy:dy + CONV_S * H1:CONV_S,
                           dx:dx + CONV_S * W1:CONV_S, :])    # (B,H1,W1,CIN)
    patches = jnp.concatenate(taps, axis=-1).reshape(B, hw, K2C)

    # Pick a row tile: large for real images, whole-image for tiny ones.
    row_tile = min(row_tile, pl.cdiv(hw, 8) * 8)
    rows_p = pl.cdiv(hw, row_tile) * row_tile
    patches = jnp.pad(patches, ((0, 0), (0, rows_p - hw), (0, 0)))
    patches = patches.astype(jnp.bfloat16)

    grid = (B, rows_p // row_tile)
    out = pl.pallas_call(
        functools.partial(_encoder_kernel, hw=hw),
        out_shape=jax.ShapeDtypeStruct((B, 1, IMG_FEAT), jnp.bfloat16),
        grid=grid,
        in_specs=[
            pl.BlockSpec((1, row_tile, K2C), lambda b, r: (b, r, 0)),
            pl.BlockSpec((K2C, ENC_SLAB), lambda b, r: (0, 0)),
            pl.BlockSpec((1, ENC_SLAB), lambda b, r: (0, 0)),
            pl.BlockSpec((ENC_CH, IMG_FEAT), lambda b, r: (0, 0)),
            pl.BlockSpec((1, IMG_FEAT), lambda b, r: (0, 0)),
        ],
        out_specs=pl.BlockSpec((1, 1, IMG_FEAT), lambda b, r: (b, 0, 0)),
        scratch_shapes=[pltpu.VMEM((1, ENC_SLAB), jnp.float32)],
        compiler_params=pltpu.CompilerParams(
            dimension_semantics=("parallel", "arbitrary"),
            vmem_limit_bytes=8 * 1024 * 1024),
    )(patches, params["w_conv_fold"], params["b_conv_fold"],
      params["w_proj"], params["b_proj"])
    return out.reshape(B, IMG_FEAT)                            # bf16


# ---------------------------------------------------------------------------
# Kernel 2: HMR iterative regressor (fc1 -> fc2 -> fused heads) x n_iter.
# Weight-DMA bound at small batch: the K grid is dropped by default (kt == 1),
# all weights resident in VMEM, one kernel invocation.
# ---------------------------------------------------------------------------
def _regressor_kernel(xf_ref, state0_ref, w1xf_ref, b1_ref, w1st_ref,
                      w2_ref, b2_ref, wh_ref, bh_ref,
                      out_ref, acc_ref, *, n_iter):
    f32 = jnp.float32
    bf16 = jnp.bfloat16
    k = pl.program_id(0)

    @pl.when(k == 0)
    def _():
        acc_ref[...] = jnp.zeros_like(acc_ref)

    # Loop-invariant xf contribution of fc1 (xf already bf16).
    acc_ref[...] += jnp.dot(xf_ref[...], w1xf_ref[...],
                            preferred_element_type=f32)

    @pl.when(k == pl.num_programs(0) - 1)
    def _():
        base = acc_ref[...] + b1_ref[...]          # (B, 1024) f32
        state = state0_ref[...]                    # (B, 256) f32, padded cols 0
        for _ in range(n_iter):
            h1 = base + jnp.dot(state.astype(bf16), w1st_ref[...],
                                preferred_element_type=f32)
            # drop1: identity (inference)
            h2 = jnp.dot(h1.astype(bf16), w2_ref[...],
                         preferred_element_type=f32) + b2_ref[...]
            # drop2: identity (inference)
            state = state + jnp.dot(h2.astype(bf16), wh_ref[...],
                                    preferred_element_type=f32) + bh_ref[...]
        out_ref[...] = state


def regress(params, xf, state0, n_iter=N_ITER, k_tile=IMG_FEAT):
    B = xf.shape[0]
    assert IMG_FEAT % k_tile == 0
    kt = IMG_FEAT // k_tile

    # Pad batch to a multiple of 8 (full sublane tiles; DMA-bound so ~free).
    Bp = pl.cdiv(B, 8) * 8
    if Bp != B:
        xf = jnp.pad(xf, ((0, Bp - B), (0, 0)))
        state0 = jnp.pad(state0, ((0, Bp - B), (0, 0)))
    xf = xf.astype(jnp.bfloat16)

    inputs = (xf, state0, params["w1_xf"], params["b1"], params["w1_state"],
              params["w2"], params["b2"], params["w_heads"], params["b_heads"])
    in_specs = [
        pl.BlockSpec((Bp, k_tile), lambda k: (0, k)),
        pl.BlockSpec((Bp, STATE_PAD), lambda k: (0, 0)),
        pl.BlockSpec((k_tile, FC_FEAT), lambda k: (k, 0)),
        pl.BlockSpec((1, FC_FEAT), lambda k: (0, 0)),
        pl.BlockSpec((STATE_PAD, FC_FEAT), lambda k: (0, 0)),
        pl.BlockSpec((FC_FEAT, FC_FEAT), lambda k: (0, 0)),
        pl.BlockSpec((1, FC_FEAT), lambda k: (0, 0)),
        pl.BlockSpec((FC_FEAT, STATE_PAD), lambda k: (0, 0)),
        pl.BlockSpec((1, STATE_PAD), lambda k: (0, 0)),
    ]
    out = pl.pallas_call(
        functools.partial(_regressor_kernel, n_iter=n_iter),
        out_shape=jax.ShapeDtypeStruct((Bp, STATE_PAD), jnp.float32),
        grid=(kt,),
        in_specs=in_specs,
        out_specs=pl.BlockSpec((Bp, STATE_PAD), lambda k: (0, 0)),
        scratch_shapes=[pltpu.VMEM((Bp, FC_FEAT), jnp.float32)],
        compiler_params=pltpu.CompilerParams(
            dimension_semantics=("arbitrary",),
            vmem_limit_bytes=20 * 1024 * 1024),
    )(*inputs)
    return out[:B]


# ---------------------------------------------------------------------------
# rot6d -> rotation matrix (Gram-Schmidt), tiny tail compute kept in JAX glue.
# ---------------------------------------------------------------------------
def rot6d_to_rotmat(x):
    x = x.reshape(-1, 3, 2)
    a1 = x[:, :, 0]
    a2 = x[:, :, 1]
    eps = 1e-12

    def _normalize(v):
        n = jnp.sqrt(jnp.sum(v * v, axis=-1, keepdims=True))
        return v / jnp.maximum(n, eps)

    b1 = _normalize(a1)
    b2 = _normalize(a2 - jnp.sum(b1 * a2, axis=-1, keepdims=True) * b1)
    b3 = jnp.cross(b1, b2)
    return jnp.stack([b1, b2, b3], axis=-1)          # (N, 3, 3)


# ---------------------------------------------------------------------------
# Deterministic parameter initialization (mirrors the module's __init__).
# ---------------------------------------------------------------------------
def _uniform(key, shape, bound):
    return jax.random.uniform(key, shape, jnp.float32, -bound, bound)


def _xavier(key, fan_in, fan_out, gain):
    bound = gain * math.sqrt(6.0 / (fan_in + fan_out))
    return _uniform(key, (fan_in, fan_out), bound)


def init_params(key):
    ks = jax.random.split(key, 20)
    bf16 = jnp.bfloat16

    # conv1: 7x7, 3->64, bias-free; PyTorch init N(0, sqrt(2/n)), n=k*k*out.
    n = CONV_K * CONV_K * ENC_CH
    w_conv = (jax.random.normal(ks[0], (CONV_K, CONV_K, CIN, ENC_CH),
                                jnp.float32) * math.sqrt(2.0 / n))
    w_conv = w_conv.reshape(K2C, ENC_CH)          # (147, 64), [dy,dx,cin] major

    # Fold inference BatchNorm2d(64) (gamma=1, beta=0, mean=0, var=1) into conv.
    gamma = jnp.ones((ENC_CH,), jnp.float32)
    beta = jnp.zeros((ENC_CH,), jnp.float32)
    mean = jnp.zeros((ENC_CH,), jnp.float32)
    var = jnp.ones((ENC_CH,), jnp.float32)
    scale = gamma * jax.lax.rsqrt(var + 1e-5)
    w_conv_fold = w_conv * scale[None, :]
    b_conv_fold = (beta - mean * scale)[None, :]
    # Pad channels to a lane-dense 128-wide slab (upper channels exact zeros).
    w_conv_fold = jnp.pad(w_conv_fold, ((0, 0), (0, ENC_SLAB - ENC_CH)))
    b_conv_fold = jnp.pad(b_conv_fold, ((0, 0), (0, ENC_SLAB - ENC_CH)))

    # Stand-in projection for maxpool + layer1..4 + avgpool (64 -> 2048).
    w_proj = _uniform(ks[1], (ENC_CH, IMG_FEAT), 1.0 / math.sqrt(ENC_CH))
    b_proj = _uniform(ks[2], (1, IMG_FEAT), 1.0 / math.sqrt(ENC_CH))

    # fc1: Linear(2048 + 144 + 10 + 3 = 2205, 1024)
    reg_in = IMG_FEAT + NPOSE + NSHAPE + NCAM
    bnd1 = 1.0 / math.sqrt(reg_in)
    w1 = _uniform(ks[3], (reg_in, FC_FEAT), bnd1)
    b1 = _uniform(ks[4], (1, FC_FEAT), bnd1)
    w1_xf = w1[:IMG_FEAT]                                      # (2048, 1024)
    w1_state = jnp.pad(w1[IMG_FEAT:],                          # (157, 1024)
                       ((0, STATE_PAD - NSTATE), (0, 0)))      # -> (256, 1024)

    # fc2: Linear(1024, 1024)
    bnd2 = 1.0 / math.sqrt(FC_FEAT)
    w2 = _uniform(ks[5], (FC_FEAT, FC_FEAT), bnd2)
    b2 = _uniform(ks[6], (1, FC_FEAT), bnd2)

    # Decoder heads, fused into one (1024, 256) matmul (xavier gain 0.01).
    w_pose = _xavier(ks[7], FC_FEAT, NPOSE, 0.01)
    b_pose = _uniform(ks[8], (1, NPOSE), bnd2)
    w_shape = _xavier(ks[9], FC_FEAT, NSHAPE, 0.01)
    b_shape = _uniform(ks[10], (1, NSHAPE), bnd2)
    w_cam = _xavier(ks[11], FC_FEAT, NCAM, 0.01)
    b_cam = _uniform(ks[12], (1, NCAM), bnd2)
    w_heads = jnp.pad(jnp.concatenate([w_pose, w_shape, w_cam], axis=1),
                      ((0, 0), (0, STATE_PAD - NSTATE)))
    b_heads = jnp.pad(jnp.concatenate([b_pose, b_shape, b_cam], axis=1),
                      ((0, 0), (0, STATE_PAD - NSTATE)))

    # TODO(synk): smpl_mean_params .npz is not available; synthesize buffers.
    init_pose = 0.1 * jax.random.normal(ks[13], (1, NPOSE), jnp.float32)
    init_shape = 0.1 * jax.random.normal(ks[14], (1, NSHAPE), jnp.float32)
    init_cam = jnp.array([[0.9, 0.0, 0.0]], jnp.float32)

    return dict(
        # encoder (conv/proj weights bf16 for the MXU; biases f32)
        w_conv_fold=w_conv_fold.astype(bf16), b_conv_fold=b_conv_fold,
        w_proj=w_proj.astype(bf16), b_proj=b_proj,
        # regressor (large weights stored bf16; biases f32)
        w1_xf=w1_xf.astype(bf16), w1_state=w1_state.astype(bf16), b1=b1,
        w2=w2.astype(bf16), b2=b2,
        w_heads=w_heads.astype(bf16), b_heads=b_heads,
        # SMPL mean params
        init_pose=init_pose, init_shape=init_shape, init_cam=init_cam,
    )


# ---------------------------------------------------------------------------
# Forward pass (mirrors HmrAuxNet_resnet.forward, inference mode).
# ---------------------------------------------------------------------------
def forward(params, x, init_pose=None, init_shape=None, init_cam=None,
            n_iter=N_ITER):
    B = x.shape[0]
    if init_pose is None:
        init_pose = jnp.broadcast_to(params["init_pose"], (B, NPOSE))
    if init_shape is None:
        init_shape = jnp.broadcast_to(params["init_shape"], (B, NSHAPE))
    if init_cam is None:
        init_cam = jnp.broadcast_to(params["init_cam"], (B, NCAM))

    xf = encode(params, x)                                       # (B, 2048) bf16

    state0 = jnp.concatenate([init_pose, init_shape, init_cam], axis=1)
    state0 = jnp.pad(state0, ((0, 0), (0, STATE_PAD - NSTATE)))  # (B, 256)

    state = regress(params, xf, state0, n_iter=n_iter)           # (B, 256)
    pred_pose = state[:, :NPOSE]
    pred_shape = state[:, NPOSE:NPOSE + NSHAPE]
    pred_cam = state[:, NPOSE + NSHAPE:NSTATE]

    pred_rotmat = rot6d_to_rotmat(pred_pose).reshape(B, 24, 3, 3)
    return pred_rotmat, pred_shape, pred_cam


if __name__ == "__main__":
    key = jax.random.PRNGKey(0)
    k_params, k_x = jax.random.split(key)

    B, Cin, H, W = 2, 3, 16, 16                 # conv1 requires 3 input chans
    x = jax.random.normal(k_x, (B, Cin, H, W), jnp.float32)      # NCHW input

    params = init_params(k_params)
    pred_rotmat, pred_shape, pred_cam = forward(params, x)
    jax.block_until_ready((pred_rotmat, pred_shape, pred_cam))

    assert pred_rotmat.shape == (B, 24, 3, 3)
    assert pred_shape.shape == (B, NSHAPE)
    assert pred_cam.shape == (B, NCAM)
    assert bool(jnp.all(jnp.isfinite(pred_rotmat)))
    assert bool(jnp.all(jnp.isfinite(pred_shape)))
    assert bool(jnp.all(jnp.isfinite(pred_cam)))
    print("KERNEL_OK")
</pallas_src>

<mosaic_0001>
module attributes {stable_mosaic.version = 11 : i64} {
  func.func @_encoder_kernel(%arg0: i32, %arg1: i32, %arg2: memref<1x64x147xbf16, #tpu.memory_space<vmem>>, %arg3: memref<147x128xbf16, #tpu.memory_space<vmem>>, %arg4: memref<1x128xf32, #tpu.memory_space<vmem>>, %arg5: memref<64x2048xbf16, #tpu.memory_space<vmem>>, %arg6: memref<1x2048xf32, #tpu.memory_space<vmem>>, %arg7: memref<1x1x2048xbf16, #tpu.memory_space<vmem>>, %arg8: memref<1x128xf32, #tpu.memory_space<vmem>>) attributes {dimension_semantics = [#tpu.dimension_semantics<parallel>, #tpu.dimension_semantics<arbitrary>], iteration_bounds = array<i64: 2, 1>, scalar_prefetch = 0 : i64, scratch_operands = 1 : i64, tpu.core_type = #tpu.core_type<tc>, window_params = [{transform_indices = @transform_0, window_bounds = array<i64: 1, 64, 147>}, {pipeline_mode = #tpu.pipeline_mode<synchronous>, transform_indices = @transform_1, window_bounds = array<i64: 147, 128>}, {pipeline_mode = #tpu.pipeline_mode<synchronous>, transform_indices = @transform_2, window_bounds = array<i64: 1, 128>}, {pipeline_mode = #tpu.pipeline_mode<synchronous>, transform_indices = @transform_3, window_bounds = array<i64: 64, 2048>}, {pipeline_mode = #tpu.pipeline_mode<synchronous>, transform_indices = @transform_4, window_bounds = array<i64: 1, 2048>}, {transform_indices = @transform_5, window_bounds = array<i64: 1, 1, 2048>}]} {
    %c0_i32 = arith.constant 0 : i32
    %0 = arith.cmpi eq, %arg1, %c0_i32 : i32
    %1 = arith.extui %0 : i1 to i32
    %c0_i32_0 = arith.constant 0 : i32
    %2 = arith.cmpi ne, %1, %c0_i32_0 : i32
    scf.if %2 {
      %cst_17 = arith.constant 0.000000e+00 : f32
      %28 = vector.broadcast %cst_17 : f32 to vector<1x128xf32>
      %c0_18 = arith.constant 0 : index
      %c0_19 = arith.constant 0 : index
      %29 = vector.load %arg8[%c0_18, %c0_19] : memref<1x128xf32, #tpu.memory_space<vmem>>, vector<1x128xf32>
      tpu.vector_store %arg8[%c0_18, %c0_19], %28 {strides = array<i32>} : memref<1x128xf32, #tpu.memory_space<vmem>>, vector<1x128xf32>,
    } else {
    }
    %c0 = arith.constant 0 : index
    %c0_1 = arith.constant 0 : index
    %c0_2 = arith.constant 0 : index
    %3 = vector.load %arg2[%c0, %c0_1, %c0_2] : memref<1x64x147xbf16, #tpu.memory_space<vmem>>, vector<1x64x147xbf16>
    %4 = vector.shape_cast %3 : vector<1x64x147xbf16> to vector<64x147xbf16>
    %c0_3 = arith.constant 0 : index
    %c0_4 = arith.constant 0 : index
    %5 = vector.load %arg3[%c0_3, %c0_4] : memref<147x128xbf16, #tpu.memory_space<vmem>>, vector<147x128xbf16>
    %cst = arith.constant dense<0.000000e+00> : vector<64x128xf32>
    %6 = tpu.matmul %4, %5, %cst {dimension_numbers = #tpu.dot_dimension_numbers<[1], [0], [0], [1], [0, 0, 1, 1], [], []>} : vector<64x147xbf16>, vector<147x128xbf16>, vector<64x128xf32> -> vector<64x128xf32>
    %c0_5 = arith.constant 0 : index
    %c0_6 = arith.constant 0 : index
    %7 = vector.load %arg4[%c0_5, %c0_6] : memref<1x128xf32, #tpu.memory_space<vmem>>, vector<1x128xf32>
    %8 = vector.broadcast %7 : vector<1x128xf32> to vector<64x128xf32>
    %9 = arith.addf %6, %8 : vector<64x128xf32>
    %cst_7 = arith.constant 0.000000e+00 : f32
    %10 = vector.broadcast %cst_7 : f32 to vector<64x128xf32>
    %11 = arith.maximumf %9, %10 : vector<64x128xf32>
    %12 = tpu.iota {dimensions = array<i32: 0>} : vector<64x128xi32>
    %c64_i32 = arith.constant 64 : i32
    %13 = arith.muli %arg1, %c64_i32 : i32
    %14 = vector.broadcast %13 : i32 to vector<64x128xi32>
    %15 = arith.addi %12, %14 : vector<64x128xi32>
    %c64_i32_8 = arith.constant 64 : i32
    %16 = vector.broadcast %c64_i32_8 : i32 to vector<64x128xi32>
    %17 = arith.cmpi slt, %15, %16 : vector<64x128xi32>
    %cst_9 = arith.constant 0.000000e+00 : f32
    %18 = vector.broadcast %cst_9 : f32 to vector<64x128xf32>
    %19 = arith.select %17, %11, %18 : vector<64x128xi1>, vector<64x128xf32>
    %c0_10 = arith.constant 0 : index
    %c0_11 = arith.constant 0 : index
    %20 = vector.load %arg8[%c0_10, %c0_11] : memref<1x128xf32, #tpu.memory_space<vmem>>, vector<1x128xf32>
    %cst_12 = arith.constant dense<0.000000e+00> : vector<128xf32>
    %21 = vector.multi_reduction <add>, %19, %cst_12 [0] : vector<64x128xf32> to vector<128xf32>
    %22 = vector.shape_cast %21 : vector<128xf32> to vector<1x128xf32>
    %23 = arith.addf %20, %22 : vector<1x128xf32>
    %c0_13 = arith.constant 0 : index
    %c0_14 = arith.constant 0 : index
    %24 = vector.load %arg8[%c0_13, %c0_14] : memref<1x128xf32, #tpu.memory_space<vmem>>, vector<1x128xf32>
    tpu.vector_store %arg8[%c0_13, %c0_14], %23 {strides = array<i32>} : memref<1x128xf32, #tpu.memory_space<vmem>>, vector<1x128xf32>,
    %c0_i32_15 = arith.constant 0 : i32
    %25 = arith.cmpi eq, %arg1, %c0_i32_15 : i32
    %26 = arith.extui %25 : i1 to i32
    %c0_i32_16 = arith.constant 0 : i32
    %27 = arith.cmpi ne, %26, %c0_i32_16 : i32
    scf.if %27 {
      %c0_17 = arith.constant 0 : index
      %c0_18 = arith.constant 0 : index
      %28 = vector.load %arg8[%c0_17, %c0_18] : memref<1x128xf32, #tpu.memory_space<vmem>>, vector<1x128xf32>
      %cst_19 = arith.constant 1.562500e-02 : f32
      %29 = vector.broadcast %cst_19 : f32 to vector<1x128xf32>
      %30 = arith.mulf %28, %29 : vector<1x128xf32>
      %31 = vector.extract_strided_slice %30 {offsets = [0, 0], sizes = [1, 64], strides = [1, 1]} : vector<1x128xf32> to vector<1x64xf32>
      %32 = arith.truncf %31 : vector<1x64xf32> to vector<1x64xbf16>
      %c0_20 = arith.constant 0 : index
      %c0_21 = arith.constant 0 : index
      %33 = vector.load %arg5[%c0_20, %c0_21] : memref<64x2048xbf16, #tpu.memory_space<vmem>>, vector<64x2048xbf16>
      %cst_22 = arith.constant dense<0.000000e+00> : vector<1x2048xf32>
      %34 = tpu.matmul %32, %33, %cst_22 {dimension_numbers = #tpu.dot_dimension_numbers<[1], [0], [0], [1], [0, 0, 1, 1], [], []>} : vector<1x64xbf16>, vector<64x2048xbf16>, vector<1x2048xf32> -> vector<1x2048xf32>
      %c0_23 = arith.constant 0 : index
      %c0_24 = arith.constant 0 : index
      %35 = vector.load %arg6[%c0_23, %c0_24] : memref<1x2048xf32, #tpu.memory_space<vmem>>, vector<1x2048xf32>
      %36 = arith.addf %34, %35 : vector<1x2048xf32>
      %37 = arith.truncf %36 : vector<1x2048xf32> to vector<1x2048xbf16>
      %c0_25 = arith.constant 0 : index
      %c0_26 = arith.constant 0 : index
      %c0_27 = arith.constant 0 : index
      %38 = vector.load %arg7[%c0_25, %c0_26, %c0_27] : memref<1x1x2048xbf16, #tpu.memory_space<vmem>>, vector<1x1x2048xbf16>
      %39 = vector.shape_cast %38 : vector<1x1x2048xbf16> to vector<1x2048xbf16>
      %40 = vector.shape_cast %37 : vector<1x2048xbf16> to vector<1x1x2048xbf16>
      tpu.vector_store %arg7[%c0_25, %c0_26, %c0_27], %40 {strides = array<i32>} : memref<1x1x2048xbf16, #tpu.memory_space<vmem>>, vector<1x1x2048xbf16>,
    } else {
    }
    return
  }
  func.func @transform_0(%arg0: i32, %arg1: i32) -> (i32, i32, i32) {
    %c0_i32 = arith.constant 0 : i32
    %c0_i32_0 = arith.constant 0 : i32
    return %arg0, %arg1, %c0_i32 : i32, i32, i32
  }
  func.func @transform_1(%arg0: i32, %arg1: i32) -> (i32, i32) {
    %c0_i32 = arith.constant 0 : i32
    %c0_i32_0 = arith.constant 0 : i32
    %c0_i32_1 = arith.constant 0 : i32
    return %c0_i32, %c0_i32_0 : i32, i32
  }
  func.func @transform_2(%arg0: i32, %arg1: i32) -> (i32, i32) {
    %c0_i32 = arith.constant 0 : i32
    %c0_i32_0 = arith.constant 0 : i32
    %c0_i32_1 = arith.constant 0 : i32
    return %c0_i32, %c0_i32_0 : i32, i32
  }
  func.func @transform_3(%arg0: i32, %arg1: i32) -> (i32, i32) {
    %c0_i32 = arith.constant 0 : i32
    %c0_i32_0 = arith.constant 0 : i32
    %c0_i32_1 = arith.constant 0 : i32
    return %c0_i32, %c0_i32_0 : i32, i32
  }
  func.func @transform_4(%arg0: i32, %arg1: i32) -> (i32, i32) {
    %c0_i32 = arith.constant 0 : i32
    %c0_i32_0 = arith.constant 0 : i32
    %c0_i32_1 = arith.constant 0 : i32
    return %c0_i32, %c0_i32_0 : i32, i32
  }
  func.func @transform_5(%arg0: i32, %arg1: i32) -> (i32, i32, i32) {
    %c0_i32 = arith.constant 0 : i32
    %c0_i32_0 = arith.constant 0 : i32
    %c0_i32_1 = arith.constant 0 : i32
    return %arg0, %c0_i32, %c0_i32_0 : i32, i32, i32
  }
}

</mosaic_0001>

<llo_original>
// kernel: tpu_custom_call.1
$region0: #{tpu_custom_call.1}
  #allocation0 [shape = 'u32[]', space=smem, size = 0x4, offset = 0x4, fixed_abs, tag = 'smem constant byte address 0x4 - core index']
  #allocation1 [shape = 'u32[72,128]{1,0:T(1,128)}', space=vmem, size = 0x9000, scoped, tag = 'internal scratch']
  #allocation2 [shape = 'f32[1,128]{1,0:T(1,128)}', space=vmem, size = 0x200, scoped, tag = 'scratch operand']
  %s0 = inlined_call_operand.hbm [shape: bf16[2,64,147], index: 0, kind: input, shape index: {}]
  %s1 = inlined_call_operand.hbm [shape: bf16[147,128], index: 1, kind: input, shape index: {}]
  %s2 = inlined_call_operand.vmem [shape: f32[1,128], index: 2, kind: input, shape index: {}]
  %s3 = inlined_call_operand.hbm [shape: bf16[64,2048], index: 3, kind: input, shape index: {}]
  %s4 = inlined_call_operand.hbm [shape: f32[1,2048], index: 4, kind: input, shape index: {}]
  %s5 = inlined_call_operand.vmem [shape: bf16[2,1,2048], index: 5, kind: output, shape index: {}]
  %s6 = sld [smem:[#allocation0]]
  $region77: #{tpu_custom_call.1} parent=0
    _
  %s8 = ssub.s32 1, %s6
  %s9 = scalar_select 0, %s8, %s6
  $region1: #{tpu_custom_call.1} parent=0
    #allocation3 [shape = 'u8[65536]{0}', space=vmem, size = 0x10000, scoped, tag = 'input window, operand 0']
    #allocation4 [shape = 's32[2]{0}', space=sflag, size = 0x8, scoped, tag = 'scoped memory for tpu_custom_call.1']
    #allocation5 [shape = 'u8[38912]{0}', space=vmem, size = 0x9800, scoped, tag = 'input window, operand 1, single buffered']
    #allocation6 [shape = 's32[1]{0}', space=sflag, size = 0x4, scoped, tag = 'scoped memory for tpu_custom_call.1']
    #allocation7 [shape = 'u8[262144]{0}', space=vmem, size = 0x40000, scoped, tag = 'input window, operand 3, single buffered']
    #allocation8 [shape = 'u8[8192]{0}', space=vmem, size = 0x2000, scoped, tag = 'input window, operand 4, single buffered']
    #allocation9 [shape = 's32[1]{0}', space=sflag, size = 0x4, scoped, tag = 'scoped memory for tpu_custom_call.1']
    %10 = vsyncpa [#allocation4], 0
    %s11 = scalar_lea.sflag [#allocation4], 1
    %12 = vsyncpa %s11, 0
    %13 = vsyncpa [#allocation6], 0
    %14 = vsyncpa [#allocation9], 0
    loop: start=0, step=1, limit=4
    $region2: #{tpu_custom_call.1} parent=1 // loop_pre_header
      _
    $region3: #{tpu_custom_call.1} parent=1 // loop_header
      %s16 = sphi 0, %s20
      %p17 = scmp.ge.s32.totalorder %s16, 4
      %s23 = sphi 0, %s35
      %s24 = sphi 0, %s31
      %s25 = sphi 0, %s23
      %s26 = sphi 0, %s24
      %s27 = sphi 0, %s25
      %s28 = sphi 0, %s26
      %s40 = sphi 0, %s42
      %s43 = sphi 0, %s40
      %s44 = sphi 0, %s43
      %s60 = sphi 0, %s44
      %s64 = sphi 0, %s64
      %s66 = sphi 0, %s64
      %s67 = sphi 0, %s66
      %s81 = sphi 0, %s67
      %s85 = sphi 0, %s85
      %s87 = sphi 0, %s85
      %s88 = sphi 0, %s87
      %s102 = sphi 0, %s88
      %s106 = sphi 0, %s106
      %s108 = sphi 0, %s106
      %s109 = sphi 0, %s108
      %s123 = sphi 0, %s109
      %s127 = sphi 0, %s127
      %s129 = sphi 0, %s127
      %s130 = sphi 0, %s129
      %s144 = sphi 0, %s130
      %s150 = sphi 0, %s152
      %s153 = sphi 0, %s150
      %s154 = sphi 0, %s153
      %s170 = sphi 0, %s154
    $region4: #{tpu_custom_call.1} parent=1 // loop_header_branch
      %19 = sbr.rel (%p17) target = $region8
    $region5: #{tpu_custom_call.1} parent=1 // loop_body
      %s21 = ssub.s32 %s16, 1
      %s22 = ssub.s32 %s16, 2
      %s29 = sadd.s32 1, %s24
      %p30 = scmp.ge.s32.totalorder %s29, 1
      %s31 = scalar_select %p30, 0, %s29
      %s32 = sadd.s32 1, %s23
      %s33 = scalar_select %p30, %s32, %s23
      %p34 = scmp.ge.s32.totalorder %s33, 2
      %s35 = scalar_select %p34, 0, %s33
      %s36 = ssub.s32 %s23, %s35
      %s37 = ssub.s32 %s24, %s31
      %s38 = sor.u32 %s36, %s37
      %p39 = scmp.eq.s32.totalorder %s38, 0
      %s41 = sadd.s32 %s40, 1
      %s42 = scalar_select %p39, %s40, %s41
      %p45 = pneg %p39
      %p46 = scmp.eq.s32.totalorder %s16, 1
      %p47 = por %p45, %p46
      %p48 = scmp.ne.s32.totalorder %s40, %s43
      %p49 = scmp.eq.s32.totalorder %s16, 0
      %p50 = por %p48, %p49
      %p51 = scmp.ne.s32.totalorder %s40, %s43
      %p52 = scmp.eq.s32.totalorder %s21, 1
      %p53 = por %p51, %p52
      %p54 = scmp.ne.s32.totalorder %s43, %s44
      %p55 = scmp.eq.s32.totalorder %s21, 0
      %p56 = por %p54, %p55
      %p57 = scmp.ne.s32.totalorder %s43, %s44
      %p58 = scmp.eq.s32.totalorder %s22, 1
      %p59 = por %p57, %p58
      %p61 = scmp.ne.s32.totalorder %s44, %s60
      %p62 = scmp.eq.s32.totalorder %s22, 0
      %p63 = por %p61, %p62
      %s65 = sadd.s32 %s64, 1
      %p68 = scmp.eq.s32.totalorder %s16, 1
      %p69 = scmp.ne.s32.totalorder %s64, %s66
      %p70 = scmp.eq.s32.totalorder %s16, 0
      %p71 = por %p69, %p70
      %p72 = scmp.ne.s32.totalorder %s64, %s66
      %p73 = scmp.eq.s32.totalorder %s21, 1
      %p74 = por %p72, %p73
      %p75 = scmp.ne.s32.totalorder %s66, %s67
      %p76 = scmp.eq.s32.totalorder %s21, 0
      %p77 = por %p75, %p76
      %p78 = scmp.ne.s32.totalorder %s66, %s67
      %p79 = scmp.eq.s32.totalorder %s22, 1
      %p80 = por %p78, %p79
      %p82 = scmp.ne.s32.totalorder %s67, %s81
      %p83 = scmp.eq.s32.totalorder %s22, 0
      %p84 = por %p82, %p83
      %s86 = sadd.s32 %s85, 1
      %p89 = scmp.eq.s32.totalorder %s16, 1
      %p90 = scmp.ne.s32.totalorder %s85, %s87
      %p91 = scmp.eq.s32.totalorder %s16, 0
      %p92 = por %p90, %p91
      %p93 = scmp.ne.s32.totalorder %s85, %s87
      %p94 = scmp.eq.s32.totalorder %s21, 1
      %p95 = por %p93, %p94
      %p96 = scmp.ne.s32.totalorder %s87, %s88
      %p97 = scmp.eq.s32.totalorder %s21, 0
      %p98 = por %p96, %p97
      %p99 = scmp.ne.s32.totalorder %s87, %s88
      %p100 = scmp.eq.s32.totalorder %s22, 1
      %p101 = por %p99, %p100
      %p103 = scmp.ne.s32.totalorder %s88, %s102
      %p104 = scmp.eq.s32.totalorder %s22, 0
      %p105 = por %p103, %p104
      %s107 = sadd.s32 %s106, 1
      %p110 = scmp.eq.s32.totalorder %s16, 1
      %p111 = scmp.ne.s32.totalorder %s106, %s108
      %p112 = scmp.eq.s32.totalorder %s16, 0
      %p113 = por %p111, %p112
      %p114 = scmp.ne.s32.totalorder %s106, %s108
      %p115 = scmp.eq.s32.totalorder %s21, 1
      %p116 = por %p114, %p115
      %p117 = scmp.ne.s32.totalorder %s108, %s109
      %p118 = scmp.eq.s32.totalorder %s21, 0
      %p119 = por %p117, %p118
      %p120 = scmp.ne.s32.totalorder %s108, %s109
      %p121 = scmp.eq.s32.totalorder %s22, 1
      %p122 = por %p120, %p121
      %p124 = scmp.ne.s32.totalorder %s109, %s123
      %p125 = scmp.eq.s32.totalorder %s22, 0
      %p126 = por %p124, %p125
      %s128 = sadd.s32 %s127, 1
      %p131 = scmp.eq.s32.totalorder %s16, 1
      %p132 = scmp.ne.s32.totalorder %s127, %s129
      %p133 = scmp.eq.s32.totalorder %s16, 0
      %p134 = por %p132, %p133
      %p135 = scmp.ne.s32.totalorder %s127, %s129
      %p136 = scmp.eq.s32.totalorder %s21, 1
      %p137 = por %p135, %p136
      %p138 = scmp.ne.s32.totalorder %s129, %s130
      %p139 = scmp.eq.s32.totalorder %s21, 0
      %p140 = por %p138, %p139
      %p141 = scmp.ne.s32.totalorder %s129, %s130
      %p142 = scmp.eq.s32.totalorder %s22, 1
      %p143 = por %p141, %p142
      %p145 = scmp.ne.s32.totalorder %s130, %s144
      %p146 = scmp.eq.s32.totalorder %s22, 0
      %p147 = por %p145, %p146
      %s148 = ssub.s32 %s23, %s35
      %p149 = scmp.eq.s32.totalorder %s148, 0
      %s151 = sadd.s32 %s150, 1
      %s152 = scalar_select %p149, %s150, %s151
      %p155 = pneg %p149
      %p156 = scmp.eq.s32.totalorder %s16, 1
      %p157 = por %p155, %p156
      %p158 = scmp.ne.s32.totalorder %s150, %s153
      %p159 = scmp.eq.s32.totalorder %s16, 0
      %p160 = por %p158, %p159
      %p161 = scmp.ne.s32.totalorder %s150, %s153
      %p162 = scmp.eq.s32.totalorder %s21, 1
      %p163 = por %p161, %p162
      %p164 = scmp.ne.s32.totalorder %s153, %s154
      %p165 = scmp.eq.s32.totalorder %s21, 0
      %p166 = por %p164, %p165
      %p167 = scmp.ne.s32.totalorder %s153, %s154
      %p168 = scmp.eq.s32.totalorder %s22, 1
      %p169 = por %p167, %p168
      %p171 = scmp.ne.s32.totalorder %s154, %s170
      %p172 = scmp.eq.s32.totalorder %s22, 0
      %p173 = por %p171, %p172
      %p174 = scmp.le.s32.totalorder 1, %s16
      %p175 = scmp.lt.s32.totalorder %s16, 3
      %p176 = pnand %p174, %p175
      %p177 = pneg %p176
      // Predicated region
      $region9: #{tpu_custom_call.1} parent=5 // pred_check
        _
      $region10: #{tpu_custom_call.1} parent=5 // pred_check_branch
        %179 = sbr.rel (%p176) target = $region12
      $region11: #{tpu_custom_call.1} parent=5 // pred_region
        %s180 = ssub.s32 %s16, 1
        // Predicated region
        $region13: #{tpu_custom_call.1} parent=11 // pred_check
          %p181 = pneg %p77
        $region14: #{tpu_custom_call.1} parent=11 // pred_check_branch
          %183 = sbr.rel (%p181) target = $region16
        $region15: #{tpu_custom_call.1} parent=11 // pred_region
          %185 = vsyncadd [#allocation6], 0
          %s186 = sshll.u32 %s1, 4
          %s187 = int_to_ptr.hbm [resolvable:$true] %s186
          %s188 = sshll.u32 [#allocation5], 4
          %s189 = int_to_ptr.vmem [resolvable:$true] %s188
          %194 = dma.hbm_to_vmem [thread:$0]  %s187, 1216, %s189, [#allocation6], 64, 64, 4
        $region16: #{tpu_custom_call.1} parent=11 // pred_fallthru
          _
        // Predicated region
        $region17: #{tpu_custom_call.1} parent=11 // pred_check
          %p195 = pneg %p98
        $region18: #{tpu_custom_call.1} parent=11 // pred_check_branch
          %197 = sbr.rel (%p195) target = $region20
        $region19: #{tpu_custom_call.1} parent=11 // pred_region
          _
        $region20: #{tpu_custom_call.1} parent=11 // pred_fallthru
          _
        // Predicated region
        $region21: #{tpu_custom_call.1} parent=11 // pred_check
          %p198 = pneg %p119
        $region22: #{tpu_custom_call.1} parent=11 // pred_check_branch
          %200 = sbr.rel (%p198) target = $region24
        $region23: #{tpu_custom_call.1} parent=11 // pred_region
          %202 = vsyncadd [#allocation6], 0
          %s203 = sshll.u32 %s3, 4
          %s204 = int_to_ptr.hbm [resolvable:$true] %s203
          %s205 = sshll.u32 [#allocation7], 4
          %s206 = int_to_ptr.vmem [resolvable:$true] %s205
          %211 = dma.hbm_to_vmem [thread:$0]  %s204, 8192, %s206, [#allocation6], 1024, 1024, 64
        $region24: #{tpu_custom_call.1} parent=11 // pred_fallthru
          _
        // Predicated region
        $region25: #{tpu_custom_call.1} parent=11 // pred_check
          %p212 = pneg %p140
        $region26: #{tpu_custom_call.1} parent=11 // pred_check_branch
          %214 = sbr.rel (%p212) target = $region28
        $region27: #{tpu_custom_call.1} parent=11 // pred_region
          %216 = vsyncadd [#allocation9], 0
          %s218 = sshll.u32 %s4, 4
          %s219 = int_to_ptr.hbm [resolvable:$true] %s218
          %s220 = sshll.u32 [#allocation8], 4
          %s221 = int_to_ptr.vmem [resolvable:$true] %s220
          %223 = dma.hbm_to_vmem [thread:$0]  %s219, 256, %s221, [#allocation9]
        $region28: #{tpu_custom_call.1} parent=11 // pred_fallthru
          _
      $region12: #{tpu_custom_call.1} parent=5 // pred_fallthru
        _
      %p224 = scmp.lt.s32.totalorder %s16, 2
      // Predicated region
      $region29: #{tpu_custom_call.1} parent=5 // pred_check
        %p225 = pneg %p224
      $region30: #{tpu_custom_call.1} parent=5 // pred_check_branch
        %227 = sbr.rel (%p225) target = $region32
      $region31: #{tpu_custom_call.1} parent=5 // pred_region
        // Predicated region
        $region33: #{tpu_custom_call.1} parent=31 // pred_check
          %p228 = pneg %p50
        $region34: #{tpu_custom_call.1} parent=31 // pred_check_branch
          %230 = sbr.rel (%p228) target = $region36
        $region35: #{tpu_custom_call.1} parent=31 // pred_region
          %s231 = sand.u32 %s40, 1
          %s232 = scalar_lea.sflag [#allocation4], %s231
          %s233 = sand.u32 %s40, 1
          %s234 = smul.addr %s233, 64
          %s235 = scalar_lea.vmem [#allocation3], %s234
          %s236 = smul.u32 8, %s24
          %238 = vsyncadd %s232, 0
          %s239 = smul.addr %s236, 2
          %s240 = smul.addr %s23, 16
          %s241 = sadd.s32 %s239, %s240
          %s242 = smul.addr %s241, 4
          %s243 = scalar_lea.hbm %s0, %s242
          %s244 = sshll.u32 %s243, 4
          %s245 = int_to_ptr.hbm [resolvable:$true] %s244
          %s246 = sshll.u32 %s235, 4
          %s247 = int_to_ptr.vmem [resolvable:$true] %s246
          %252 = dma.hbm_to_vmem [thread:$0]  %s245, 1024, %s247, %s232, 128, 128, 8
        $region36: #{tpu_custom_call.1} parent=31 // pred_fallthru
          _
      $region32: #{tpu_custom_call.1} parent=5 // pred_fallthru
        _
      %p253 = scmp.le.s32.totalorder 1, %s16
      %p254 = scmp.lt.s32.totalorder %s16, 3
      %p255 = pnand %p253, %p254
      %p256 = pneg %p255
      // Predicated region
      $region37: #{tpu_custom_call.1} parent=5 // pred_check
        _
      $region38: #{tpu_custom_call.1} parent=5 // pred_check_branch
        %258 = sbr.rel (%p255) target = $region40
      $region39: #{tpu_custom_call.1} parent=5 // pred_region
        %s259 = ssub.s32 %s16, 1
        %s260 = sand.u32 %s43, 1
        %s261 = scalar_lea.sflag [#allocation4], %s260
        %s262 = sand.u32 %s43, 1
        %s263 = smul.addr %s262, 64
        %s264 = scalar_lea.vmem [#allocation3], %s263
        // Predicated region
        $region41: #{tpu_custom_call.1} parent=39 // pred_check
          %p265 = pneg %p56
        $region42: #{tpu_custom_call.1} parent=39 // pred_check_branch
          %267 = sbr.rel (%p265) target = $region44
        $region43: #{tpu_custom_call.1} parent=39 // pred_region
          %269 = dma.done %s261, 1024
        $region44: #{tpu_custom_call.1} parent=39 // pred_fallthru
          _
        // Predicated region
        $region45: #{tpu_custom_call.1} parent=39 // pred_check
          %p270 = pneg %p77
        $region46: #{tpu_custom_call.1} parent=39 // pred_check_branch
          %272 = sbr.rel (%p270) target = $region48
        $region47: #{tpu_custom_call.1} parent=39 // pred_region
          %274 = dma.done [#allocation6], 1216
        $region48: #{tpu_custom_call.1} parent=39 // pred_fallthru
          _
        // Predicated region
        $region49: #{tpu_custom_call.1} parent=39 // pred_check
          %p275 = pneg %p119
        $region50: #{tpu_custom_call.1} parent=39 // pred_check_branch
          %277 = sbr.rel (%p275) target = $region52
        $region51: #{tpu_custom_call.1} parent=39 // pred_region
          %279 = dma.done [#allocation6], 8192
        $region52: #{tpu_custom_call.1} parent=39 // pred_fallthru
          _
        // Predicated region
        $region53: #{tpu_custom_call.1} parent=39 // pred_check
          %p280 = pneg %p140
        $region54: #{tpu_custom_call.1} parent=39 // pred_check_branch
          %282 = sbr.rel (%p280) target = $region56
        $region55: #{tpu_custom_call.1} parent=39 // pred_region
          %284 = dma.done [#allocation9], 256
        $region56: #{tpu_custom_call.1} parent=39 // pred_fallthru
          _
        %s285 = sand.u32 %s43, 1
        %s286 = scalar_lea.sflag [#allocation4], %s285
        %s287 = sand.u32 %s43, 1
        %s288 = smul.addr %s287, 64
        %s289 = scalar_lea.vmem [#allocation3], %s288
        %p290 = pneg %p56
        %p291 = pneg %p53
        %p292 = pneg %p77
        %p293 = pneg %p74
        %p294 = pneg %p98
        %p295 = pneg %p95
        %p296 = pneg %p119
        %p297 = pneg %p116
        %p298 = pneg %p140
        %p299 = pneg %p137
        %p300 = pneg %p166
        %p301 = pneg %p163
        %p302 = scmp.lt.s32.totalorder %s25, 1
        %s303 = scalar_select %p302, %s25, 1
        %s304 = smul.addr %s303, 16
        %s305 = scalar_lea.vmem %s5, %s304
        %s306 = smul.u32 8, %s26
        %p307 = scmp.lt.s32.totalorder %s25, 1
        %s308 = scalar_select %p307, %s25, 1
        %s309 = smul.addr %s308, 16
        %s310 = scalar_lea.vmem %s5, %s309
        %p312 = scmp.eq.s32.totalorder %s26, 0
        // Predicated region
        $region57: #{tpu_custom_call.1} parent=39 // pred_check
          %p313 = pneg %p312
        $region58: #{tpu_custom_call.1} parent=39 // pred_check_branch
          %315 = sbr.rel (%p313) target = $region60
        $region59: #{tpu_custom_call.1} parent=39 // pred_region
          %316 = vst [vmem:[#allocation2] sm:$0x1] 0.0
        $region60: #{tpu_custom_call.1} parent=39 // pred_fallthru
          _
        %v317 = vld [vmem:[%s264] sm:$0xff]
        %v318 = vld [vmem:[%s264 + $0x8] sm:$0xff]
        %v319 = vld [vmem:[%s264 + $0x10] sm:$0xff]
        %v320 = vld [vmem:[%s264 + $0x18] sm:$0xff]
        %v321 = vld [vmem:[%s264 + $0x20] sm:$0xff]
        %v322 = vld [vmem:[%s264 + $0x28] sm:$0xff]
        %v323 = vld [vmem:[%s264 + $0x30] sm:$0xff]
        %v324 = vld [vmem:[%s264 + $0x38] sm:$0xff]
        %v325 = vld [vmem:[#allocation5] sm:$0xf]
        %v326 = vld [vmem:[#allocation5 + $0x4] sm:$0xf]
        %v327 = vld [vmem:[#allocation5 + $0x8] sm:$0xf]
        %v328 = vld [vmem:[#allocation5 + $0xc] sm:$0xf]
        %v329 = vld [vmem:[#allocation5 + $0x10] sm:$0xf]
        %v330 = vld [vmem:[#allocation5 + $0x14] sm:$0xf]
        %v331 = vld [vmem:[#allocation5 + $0x18] sm:$0xf]
        %v332 = vld [vmem:[#allocation5 + $0x1c] sm:$0xf]
        %v333 = vld [vmem:[#allocation5 + $0x20] sm:$0xf]
        %v334 = vld [vmem:[#allocation5 + $0x24] sm:$0xf]
        %v335 = vld [vmem:[#allocation5 + $0x28] sm:$0xf]
        %v336 = vld [vmem:[#allocation5 + $0x2c] sm:$0xf]
        %v337 = vld [vmem:[#allocation5 + $0x30] sm:$0xf]
        %v338 = vld [vmem:[#allocation5 + $0x34] sm:$0xf]
        %v339 = vld [vmem:[#allocation5 + $0x38] sm:$0xf]
        %v340 = vld [vmem:[#allocation5 + $0x3c] sm:$0xf]
        %v341 = vld [vmem:[#allocation5 + $0x40] sm:$0xf]
        %v342 = vld [vmem:[#allocation5 + $0x44] sm:$0xf]
        %v343 = vld [vmem:[#allocation5 + $0x48] sm:$0x3]
        %v344 = vld [vmem:[%s2] sm:$0x1]
        %v346 = vperm.slane %v344, 0
        %v356 = vunpack.c.l.b16 %v317
        %v357 = vunpack.c.h.b16 %v317
        %v358 = vunpack.c.l.b16 %v318
        %v359 = vunpack.c.h.b16 %v318
        %v360 = vunpack.c.l.b16 %v319
        %v361 = vunpack.c.h.b16 %v319
        %v362 = vunpack.c.l.b16 %v320
        %v363 = vunpack.c.h.b16 %v320
        %v364 = vunpack.c.l.b16 %v321
        %v365 = vunpack.c.h.b16 %v321
        %v366 = vunpack.c.l.b16 %v322
        %v367 = vunpack.c.h.b16 %v322
        %v368 = vunpack.c.l.b16 %v323
        %v369 = vunpack.c.h.b16 %v323
        %v370 = vunpack.c.l.b16 %v324
        %v371 = vunpack.c.h.b16 %v324
        %v372 = vpack.c.b16 %v358, %v356
        %v373 = vpack.c.b16 %v359, %v357
        %v374 = vpack.c.b16 %v362, %v360
        %v375 = vpack.c.b16 %v363, %v361
        %v376 = vpack.c.b16 %v366, %v364
        %v377 = vpack.c.b16 %v367, %v365
        %v378 = vpack.c.b16 %v370, %v368
        %v379 = vpack.c.b16 %v371, %v369
        %v403 = vunpack.c.l.b16 %v325
        %v404 = vunpack.c.l.b16 %v326
        %v405 = vunpack.c.l.b16 %v327
        %v406 = vunpack.c.l.b16 %v328
        %v407 = vunpack.c.l.b16 %v329
        %v408 = vunpack.c.l.b16 %v330
        %v409 = vunpack.c.l.b16 %v331
        %v410 = vunpack.c.l.b16 %v332
        %v411 = vunpack.c.l.b16 %v333
        %v412 = vunpack.c.l.b16 %v334
        %v413 = vunpack.c.l.b16 %v335
        %v414 = vunpack.c.l.b16 %v336
        %v415 = vunpack.c.l.b16 %v337
        %v416 = vunpack.c.l.b16 %v338
        %v417 = vunpack.c.l.b16 %v339
        %v418 = vunpack.c.l.b16 %v340
        %v419 = vunpack.c.l.b16 %v341
        %v420 = vunpack.c.l.b16 %v342
        %v421 = vunpack.c.l.b16 %v343
        %v422 = vpack.c.b16 %v404, %v403
        %v423 = vpack.c.b16 %v406, %v405
        %v424 = vpack.c.b16 %v408, %v407
        %v425 = vpack.c.b16 %v410, %v409
        %v426 = vpack.c.b16 %v412, %v411
        %v427 = vpack.c.b16 %v414, %v413
        %v428 = vpack.c.b16 %v416, %v415
        %v429 = vpack.c.b16 %v418, %v417
        %v430 = vpack.c.b16 %v420, %v419
        %v431 = vpack.c.b16 %v421, %v421
        %vm441 = vcmask 154624
        %v443 = vsel %vm441, %v373, 0
        %v446 = vsel %vm441, %v375, 0
        %v449 = vsel %vm441, %v377, 0
        %v452 = vsel %vm441, %v379, 0
        %vm454 = vcmask 1040384
        %vm455 = vcmask 1041408
        %v456 = vsel %vm454, 4294967295, 65535
        %v457 = vsel %vm455, %v456, 0
        %v459 = vand.u32 %v431, %v457
        %461 = vmatpush.bf16.msra.mxu0 %v429
        %462 = vmatpush.bf16.msra.mxu0 %v428
        %463 = vmatpush.bf16.msra.mxu0 %v427
        %464 = vmatpush.bf16.msra.mxu0 %v426
        %465 = vmatpush.bf16.msra.mxu0 %v425
        %466 = vmatpush.bf16.msra.mxu0 %v424
        %467 = vmatpush.bf16.msra.mxu0 %v423
        %468 = vmatpush.bf16.msra.mxu0 %v422
        %469 = vmatmul.bf16.gmra.mxu0 %v372
        %v470 = vpop.f32.mrf.mxu0
        %v471 = vadd.f32 %v346, %v470
        %v472 = vpop.f32.mrf.mxu0
        %v473 = vadd.f32 %v346, %v472
        %474 = vmatmul.bf16.gmra.mxu0 %v374
        %v475 = vpop.f32.mrf.mxu0
        %v476 = vadd.f32 %v346, %v475
        %v477 = vpop.f32.mrf.mxu0
        %v478 = vadd.f32 %v346, %v477
        %479 = vmatmul.bf16.gmra.mxu0 %v376
        %v480 = vpop.f32.mrf.mxu0
        %v481 = vadd.f32 %v346, %v480
        %v482 = vpop.f32.mrf.mxu0
        %v483 = vadd.f32 %v346, %v482
        %484 = vmatmul.bf16.gmra.mxu0 %v378
        %v485 = vpop.f32.mrf.mxu0
        %v486 = vadd.f32 %v346, %v485
        %v487 = vpop.f32.mrf.mxu0
        %v488 = vadd.f32 %v346, %v487
        %489 = vdwg.mxu0
        %490 = vmatpush.bf16.msra.mxu0 0
        %491 = vmatpush.bf16.msra.mxu0 0
        %492 = vmatpush.bf16.msra.mxu0 0
        %493 = vmatpush.bf16.msra.mxu0 0
        %494 = vmatpush.bf16.msra.mxu0 0
        %495 = vmatpush.bf16.msra.mxu0 0
        %496 = vmatpush.bf16.msra.mxu0 %v459
        %497 = vmatpush.bf16.msra.mxu0 %v430
        %498 = vmatmul.bf16.gmra.mxu0 %v443
        %v499 = vpop.f32.mrf.mxu0
        %v500 = vadd.f32 %v471, %v499
        %v501 = vpop.f32.mrf.mxu0
        %v502 = vadd.f32 %v473, %v501
        %503 = vmatmul.bf16.gmra.mxu0 %v446
        %v504 = vpop.f32.mrf.mxu0
        %v505 = vadd.f32 %v476, %v504
        %v506 = vpop.f32.mrf.mxu0
        %v507 = vadd.f32 %v478, %v506
        %508 = vmatmul.bf16.gmra.mxu0 %v449
        %v509 = vpop.f32.mrf.mxu0
        %v510 = vadd.f32 %v481, %v509
        %v511 = vpop.f32.mrf.mxu0
        %v512 = vadd.f32 %v483, %v511
        %513 = vmatmul.bf16.gmra.mxu0 %v452
        %v514 = vpop.f32.mrf.mxu0
        %v515 = vadd.f32 %v486, %v514
        %v516 = vpop.f32.mrf.mxu0
        %v517 = vadd.f32 %v488, %v516
        %518 = vdwg.mxu0
        %v519 = vmax.f32 %v500, 0.0
        %v520 = vmax.f32 %v502, 0.0
        %v521 = vmax.f32 %v505, 0.0
        %v522 = vmax.f32 %v507, 0.0
        %v523 = vmax.f32 %v510, 0.0
        %v524 = vmax.f32 %v512, 0.0
        %v525 = vmax.f32 %v515, 0.0
        %v526 = vmax.f32 %v517, 0.0
        %v527 = vlaneseq
        %v528 = vshrl.u32 %v527, 7
        %v529 = vadd.s32 %v528, 8
        %v530 = vadd.s32 %v528, 16
        %v531 = vadd.s32 %v528, 24
        %v532 = vadd.s32 %v528, 32
        %v533 = vadd.s32 %v528, 40
        %v534 = vadd.s32 %v528, 48
        %v535 = vadd.s32 %v528, 56
        %s536 = smul.u32 %s26, 64
        %v537 = vstv %s536
        %v538 = vadd.s32 %v528, %v537
        %v539 = vadd.s32 %v529, %v537
        %v540 = vadd.s32 %v530, %v537
        %v541 = vadd.s32 %v531, %v537
        %v542 = vadd.s32 %v532, %v537
        %v543 = vadd.s32 %v533, %v537
        %v544 = vadd.s32 %v534, %v537
        %v545 = vadd.s32 %v535, %v537
        %vm546 = vcmp.lt.s32.totalorder %v538, 64
        %vm547 = vcmp.lt.s32.totalorder %v539, 64
        %vm548 = vcmp.lt.s32.totalorder %v540, 64
        %vm549 = vcmp.lt.s32.totalorder %v541, 64
        %vm550 = vcmp.lt.s32.totalorder %v542, 64
        %vm551 = vcmp.lt.s32.totalorder %v543, 64
        %vm552 = vcmp.lt.s32.totalorder %v544, 64
        %vm553 = vcmp.lt.s32.totalorder %v545, 64
        %v554 = vsel %vm546, %v519, 0.0
        %v555 = vsel %vm547, %v520, 0.0
        %v556 = vsel %vm548, %v521, 0.0
        %v557 = vsel %vm549, %v522, 0.0
        %v558 = vsel %vm550, %v523, 0.0
        %v559 = vsel %vm551, %v524, 0.0
        %v560 = vsel %vm552, %v525, 0.0
        %v561 = vsel %vm553, %v526, 0.0
        %v562 = vld [vmem:[#allocation2] sm:$0x1]
        %v563 = vadd.f32 %v554, %v555
        %v564 = vadd.f32 %v563, %v556
        %v565 = vadd.f32 %v564, %v557
        %v566 = vadd.f32 %v565, %v558
        %v567 = vadd.f32 %v566, %v559
        %v568 = vadd.f32 %v567, %v560
        %v569 = vadd.f32 %v568, %v561
        %v570 = vrot.slane %v569, 4
        %v571 = vadd.f32 %v569, %v570
        %v572 = vrot.slane %v571, 2
        %v573 = vadd.f32 %v571, %v572
        %v574 = vrot.slane %v573, 1
        %v575 = vadd.f32 %v573, %v574
        %v576 = vadd.f32 %v562, %v575
        %577 = vst [vmem:[#allocation2] sm:$0x1] %v576
        // Predicated region
        $region61: #{tpu_custom_call.1} parent=39 // pred_check
          %p578 = pneg %p312
        $region62: #{tpu_custom_call.1} parent=39 // pred_check_branch
          %580 = sbr.rel (%p578) target = $region64
        $region63: #{tpu_custom_call.1} parent=39 // pred_region
          %v581 = vld [vmem:[#allocation2] sm:$0x1]
          %v582 = vmul.f32 %v581, 0.015625
          %v583 = vpack.c.bf16 %v582, %v582
          %v584 = vld [vmem:[#allocation7] sm:$0xff]
          %v585 = vld [vmem:[#allocation7 + $0x8] sm:$0xff]
          %v586 = vld [vmem:[#allocation7 + $0x10] sm:$0xff]
          %v587 = vld [vmem:[#allocation7 + $0x18] sm:$0xff]
          %v588 = vld [vmem:[#allocation7 + $0x20] sm:$0xff]
          %v589 = vld [vmem:[#allocation7 + $0x28] sm:$0xff]
          %v590 = vld [vmem:[#allocation7 + $0x30] sm:$0xff]
          %v591 = vld [vmem:[#allocation7 + $0x38] sm:$0xff]
          %v592 = vld [vmem:[#allocation7 + $0x40] sm:$0xff]
          %v593 = vld [vmem:[#allocation7 + $0x48] sm:$0xff]
          %v594 = vld [vmem:[#allocation7 + $0x50] sm:$0xff]
          %v595 = vld [vmem:[#allocation7 + $0x58] sm:$0xff]
          %v596 = vld [vmem:[#allocation7 + $0x60] sm:$0xff]
          %v597 = vld [vmem:[#allocation7 + $0x68] sm:$0xff]
          %v598 = vld [vmem:[#allocation7 + $0x70] sm:$0xff]
          %v599 = vld [vmem:[#allocation7 + $0x78] sm:$0xff]
          %v600 = vld [vmem:[#allocation7 + $0x80] sm:$0xff]
          %v601 = vld [vmem:[#allocation7 + $0x88] sm:$0xff]
          %v602 = vld [vmem:[#allocation7 + $0x90] sm:$0xff]
          %v603 = vld [vmem:[#allocation7 + $0x98] sm:$0xff]
          %v604 = vld [vmem:[#allocation7 + $0xa0] sm:$0xff]
          %v605 = vld [vmem:[#allocation7 + $0xa8] sm:$0xff]
          %v606 = vld [vmem:[#allocation7 + $0xb0] sm:$0xff]
          %v607 = vld [vmem:[#allocation7 + $0xb8] sm:$0xff]
          %v608 = vld [vmem:[#allocation7 + $0xc0] sm:$0xff]
          %v609 = vld [vmem:[#allocation7 + $0xc8] sm:$0xff]
          %v610 = vld [vmem:[#allocation7 + $0xd0] sm:$0xff]
          %v611 = vld [vmem:[#allocation7 + $0xd8] sm:$0xff]
          %v612 = vld [vmem:[#allocation7 + $0xe0] sm:$0xff]
          %v613 = vld [vmem:[#allocation7 + $0xe8] sm:$0xff]
          %v614 = vld [vmem:[#allocation7 + $0xf0] sm:$0xff]
          %v615 = vld [vmem:[#allocation7 + $0xf8] sm:$0xff]
          %v616 = vld [vmem:[#allocation7 + $0x100] sm:$0xff]
          %v617 = vld [vmem:[#allocation7 + $0x108] sm:$0xff]
          %v618 = vld [vmem:[#allocation7 + $0x110] sm:$0xff]
          %v619 = vld [vmem:[#allocation7 + $0x118] sm:$0xff]
          %v620 = vld [vmem:[#allocation7 + $0x120] sm:$0xff]
          %v621 = vld [vmem:[#allocation7 + $0x128] sm:$0xff]
          %v622 = vld [vmem:[#allocation7 + $0x130] sm:$0xff]
          %v623 = vld [vmem:[#allocation7 + $0x138] sm:$0xff]
          %v624 = vld [vmem:[#allocation7 + $0x140] sm:$0xff]
          %v625 = vld [vmem:[#allocation7 + $0x148] sm:$0xff]
          %v626 = vld [vmem:[#allocation7 + $0x150] sm:$0xff]
          %v627 = vld [vmem:[#allocation7 + $0x158] sm:$0xff]
          %v628 = vld [vmem:[#allocation7 + $0x160] sm:$0xff]
          %v629 = vld [vmem:[#allocation7 + $0x168] sm:$0xff]
          %v630 = vld [vmem:[#allocation7 + $0x170] sm:$0xff]
          %v631 = vld [vmem:[#allocation7 + $0x178] sm:$0xff]
          %v632 = vld [vmem:[#allocation7 + $0x180] sm:$0xff]
          %v633 = vld [vmem:[#allocation7 + $0x188] sm:$0xff]
          %v634 = vld [vmem:[#allocation7 + $0x190] sm:$0xff]
          %v635 = vld [vmem:[#allocation7 + $0x198] sm:$0xff]
          %v636 = vld [vmem:[#allocation7 + $0x1a0] sm:$0xff]
          %v637 = vld [vmem:[#allocation7 + $0x1a8] sm:$0xff]
          %v638 = vld [vmem:[#allocation7 + $0x1b0] sm:$0xff]
          %v639 = vld [vmem:[#allocation7 + $0x1b8] sm:$0xff]
          %v640 = vld [vmem:[#allocation7 + $0x1c0] sm:$0xff]
          %v641 = vld [vmem:[#allocation7 + $0x1c8] sm:$0xff]
          %v642 = vld [vmem:[#allocation7 + $0x1d0] sm:$0xff]
          %v643 = vld [vmem:[#allocation7 + $0x1d8] sm:$0xff]
          %v644 = vld [vmem:[#allocation7 + $0x1e0] sm:$0xff]
          %v645 = vld [vmem:[#allocation7 + $0x1e8] sm:$0xff]
          %v646 = vld [vmem:[#allocation7 + $0x1f0] sm:$0xff]
          %v647 = vld [vmem:[#allocation7 + $0x1f8] sm:$0xff]
          %v648 = vld [vmem:[#allocation8] sm:$0xff]
          %v649 = vld [vmem:[#allocation8 + $0x8] sm:$0xff]
          %v714 = vunpack.c.l.b16 %v584
          %v715 = vunpack.c.h.b16 %v584
          %v716 = vunpack.c.l.b16 %v585
          %v717 = vunpack.c.h.b16 %v585
          %v718 = vunpack.c.l.b16 %v586
          %v719 = vunpack.c.h.b16 %v586
          %v720 = vunpack.c.l.b16 %v587
          %v721 = vunpack.c.h.b16 %v587
          %v722 = vunpack.c.l.b16 %v588
          %v723 = vunpack.c.h.b16 %v588
          %v724 = vunpack.c.l.b16 %v589
          %v725 = vunpack.c.h.b16 %v589
          %v726 = vunpack.c.l.b16 %v590
          %v727 = vunpack.c.h.b16 %v590
          %v728 = vunpack.c.l.b16 %v591
          %v729 = vunpack.c.h.b16 %v591
          %v730 = vunpack.c.l.b16 %v592
          %v731 = vunpack.c.h.b16 %v592
          %v732 = vunpack.c.l.b16 %v593
          %v733 = vunpack.c.h.b16 %v593
          %v734 = vunpack.c.l.b16 %v594
          %v735 = vunpack.c.h.b16 %v594
          %v736 = vunpack.c.l.b16 %v595
          %v737 = vunpack.c.h.b16 %v595
          %v738 = vunpack.c.l.b16 %v596
          %v739 = vunpack.c.h.b16 %v596
          %v740 = vunpack.c.l.b16 %v597
          %v741 = vunpack.c.h.b16 %v597
          %v742 = vunpack.c.l.b16 %v598
          %v743 = vunpack.c.h.b16 %v598
          %v744 = vunpack.c.l.b16 %v599
          %v745 = vunpack.c.h.b16 %v599
          %v746 = vunpack.c.l.b16 %v600
          %v747 = vunpack.c.h.b16 %v600
          %v748 = vunpack.c.l.b16 %v601
          %v749 = vunpack.c.h.b16 %v601
          %v750 = vunpack.c.l.b16 %v602
          %v751 = vunpack.c.h.b16 %v602
          %v752 = vunpack.c.l.b16 %v603
          %v753 = vunpack.c.h.b16 %v603
          %v754 = vunpack.c.l.b16 %v604
          %v755 = vunpack.c.h.b16 %v604
          %v756 = vunpack.c.l.b16 %v605
          %v757 = vunpack.c.h.b16 %v605
          %v758 = vunpack.c.l.b16 %v606
          %v759 = vunpack.c.h.b16 %v606
          %v760 = vunpack.c.l.b16 %v607
          %v761 = vunpack.c.h.b16 %v607
          %v762 = vunpack.c.l.b16 %v608
          %v763 = vunpack.c.h.b16 %v608
          %v764 = vunpack.c.l.b16 %v609
          %v765 = vunpack.c.h.b16 %v609
          %v766 = vunpack.c.l.b16 %v610
          %v767 = vunpack.c.h.b16 %v610
          %v768 = vunpack.c.l.b16 %v611
          %v769 = vunpack.c.h.b16 %v611
          %v770 = vunpack.c.l.b16 %v612
          %v771 = vunpack.c.h.b16 %v612
          %v772 = vunpack.c.l.b16 %v613
          %v773 = vunpack.c.h.b16 %v613
          %v774 = vunpack.c.l.b16 %v614
          %v775 = vunpack.c.h.b16 %v614
          %v776 = vunpack.c.l.b16 %v615
          %v777 = vunpack.c.h.b16 %v615
          %v778 = vunpack.c.l.b16 %v616
          %v779 = vunpack.c.h.b16 %v616
          %v780 = vunpack.c.l.b16 %v617
          %v781 = vunpack.c.h.b16 %v617
          %v782 = vunpack.c.l.b16 %v618
          %v783 = vunpack.c.h.b16 %v618
          %v784 = vunpack.c.l.b16 %v619
          %v785 = vunpack.c.h.b16 %v619
          %v786 = vunpack.c.l.b16 %v620
          %v787 = vunpack.c.h.b16 %v620
          %v788 = vunpack.c.l.b16 %v621
          %v789 = vunpack.c.h.b16 %v621
          %v790 = vunpack.c.l.b16 %v622
          %v791 = vunpack.c.h.b16 %v622
          %v792 = vunpack.c.l.b16 %v623
          %v793 = vunpack.c.h.b16 %v623
          %v794 = vunpack.c.l.b16 %v624
          %v795 = vunpack.c.h.b16 %v624
          %v796 = vunpack.c.l.b16 %v625
          %v797 = vunpack.c.h.b16 %v625
          %v798 = vunpack.c.l.b16 %v626
          %v799 = vunpack.c.h.b16 %v626
          %v800 = vunpack.c.l.b16 %v627
          %v801 = vunpack.c.h.b16 %v627
          %v802 = vunpack.c.l.b16 %v628
          %v803 = vunpack.c.h.b16 %v628
          %v804 = vunpack.c.l.b16 %v629
          %v805 = vunpack.c.h.b16 %v629
          %v806 = vunpack.c.l.b16 %v630
          %v807 = vunpack.c.h.b16 %v630
          %v808 = vunpack.c.l.b16 %v631
          %v809 = vunpack.c.h.b16 %v631
          %v810 = vunpack.c.l.b16 %v632
          %v811 = vunpack.c.h.b16 %v632
          %v812 = vunpack.c.l.b16 %v633
          %v813 = vunpack.c.h.b16 %v633
          %v814 = vunpack.c.l.b16 %v634
          %v815 = vunpack.c.h.b16 %v634
          %v816 = vunpack.c.l.b16 %v635
          %v817 = vunpack.c.h.b16 %v635
          %v818 = vunpack.c.l.b16 %v636
          %v819 = vunpack.c.h.b16 %v636
          %v820 = vunpack.c.l.b16 %v637
          %v821 = vunpack.c.h.b16 %v637
          %v822 = vunpack.c.l.b16 %v638
          %v823 = vunpack.c.h.b16 %v638
          %v824 = vunpack.c.l.b16 %v639
          %v825 = vunpack.c.h.b16 %v639
          %v826 = vunpack.c.l.b16 %v640
          %v827 = vunpack.c.h.b16 %v640
          %v828 = vunpack.c.l.b16 %v641
          %v829 = vunpack.c.h.b16 %v641
          %v830 = vunpack.c.l.b16 %v642
          %v831 = vunpack.c.h.b16 %v642
          %v832 = vunpack.c.l.b16 %v643
          %v833 = vunpack.c.h.b16 %v643
          %v834 = vunpack.c.l.b16 %v644
          %v835 = vunpack.c.h.b16 %v644
          %v836 = vunpack.c.l.b16 %v645
          %v837 = vunpack.c.h.b16 %v645
          %v838 = vunpack.c.l.b16 %v646
          %v839 = vunpack.c.h.b16 %v646
          %v840 = vunpack.c.l.b16 %v647
          %v841 = vunpack.c.h.b16 %v647
          %v842 = vpack.c.b16 %v730, %v714
          %v843 = vpack.c.b16 %v731, %v715
          %v844 = vpack.c.b16 %v732, %v716
          %v845 = vpack.c.b16 %v733, %v717
          %v846 = vpack.c.b16 %v734, %v718
          %v847 = vpack.c.b16 %v735, %v719
          %v848 = vpack.c.b16 %v736, %v720
          %v849 = vpack.c.b16 %v737, %v721
          %v850 = vpack.c.b16 %v738, %v722
          %v851 = vpack.c.b16 %v739, %v723
          %v852 = vpack.c.b16 %v740, %v724
          %v853 = vpack.c.b16 %v741, %v725
          %v854 = vpack.c.b16 %v742, %v726
          %v855 = vpack.c.b16 %v743, %v727
          %v856 = vpack.c.b16 %v744, %v728
          %v857 = vpack.c.b16 %v745, %v729
          %v858 = vpack.c.b16 %v762, %v746
          %v859 = vpack.c.b16 %v763, %v747
          %v860 = vpack.c.b16 %v764, %v748
          %v861 = vpack.c.b16 %v765, %v749
          %v862 = vpack.c.b16 %v766, %v750
          %v863 = vpack.c.b16 %v767, %v751
          %v864 = vpack.c.b16 %v768, %v752
          %v865 = vpack.c.b16 %v769, %v753
          %v866 = vpack.c.b16 %v770, %v754
          %v867 = vpack.c.b16 %v771, %v755
          %v868 = vpack.c.b16 %v772, %v756
          %v869 = vpack.c.b16 %v773, %v757
          %v870 = vpack.c.b16 %v774, %v758
          %v871 = vpack.c.b16 %v775, %v759
          %v872 = vpack.c.b16 %v776, %v760
          %v873 = vpack.c.b16 %v777, %v761
          %v874 = vpack.c.b16 %v794, %v778
          %v875 = vpack.c.b16 %v795, %v779
          %v876 = vpack.c.b16 %v796, %v780
          %v877 = vpack.c.b16 %v797, %v781
          %v878 = vpack.c.b16 %v798, %v782
          %v879 = vpack.c.b16 %v799, %v783
          %v880 = vpack.c.b16 %v800, %v784
          %v881 = vpack.c.b16 %v801, %v785
          %v882 = vpack.c.b16 %v802, %v786
          %v883 = vpack.c.b16 %v803, %v787
          %v884 = vpack.c.b16 %v804, %v788
          %v885 = vpack.c.b16 %v805, %v789
          %v886 = vpack.c.b16 %v806, %v790
          %v887 = vpack.c.b16 %v807, %v791
          %v888 = vpack.c.b16 %v808, %v792
          %v889 = vpack.c.b16 %v809, %v793
          %v890 = vpack.c.b16 %v826, %v810
          %v891 = vpack.c.b16 %v827, %v811
          %v892 = vpack.c.b16 %v828, %v812
          %v893 = vpack.c.b16 %v829, %v813
          %v894 = vpack.c.b16 %v830, %v814
          %v895 = vpack.c.b16 %v831, %v815
          %v896 = vpack.c.b16 %v832, %v816
          %v897 = vpack.c.b16 %v833, %v817
          %v898 = vpack.c.b16 %v834, %v818
          %v899 = vpack.c.b16 %v835, %v819
          %v900 = vpack.c.b16 %v836, %v820
          %v901 = vpack.c.b16 %v837, %v821
          %v902 = vpack.c.b16 %v838, %v822
          %v903 = vpack.c.b16 %v839, %v823
          %v904 = vpack.c.b16 %v840, %v824
          %v905 = vpack.c.b16 %v841, %v825
          %v972 = vperm.slane %v648, 0
          %v973 = vperm.slane %v648, 1
          %v974 = vperm.slane %v648, 2
          %v975 = vperm.slane %v648, 3
          %v976 = vperm.slane %v648, 4
          %v977 = vperm.slane %v648, 5
          %v978 = vperm.slane %v648, 6
          %v979 = vperm.slane %v648, 7
          %v980 = vperm.slane %v649, 0
          %v981 = vperm.slane %v649, 1
          %v982 = vperm.slane %v649, 2
          %v983 = vperm.slane %v649, 3
          %v984 = vperm.slane %v649, 4
          %v985 = vperm.slane %v649, 5
          %v986 = vperm.slane %v649, 6
          %v987 = vperm.slane %v649, 7
          %vm1004 = vcmask 523264
          %v1006 = vsel %vm1004, %v583, 0
          %1008 = vmatpush.bf16.msra.mxu0 0
          %1009 = vmatpush.bf16.msra.mxu0 0
          %1010 = vmatpush.bf16.msra.mxu0 0
          %1011 = vmatpush.bf16.msra.mxu0 0
          %1012 = vmatpush.bf16.msra.mxu0 %v890
          %1013 = vmatpush.bf16.msra.mxu0 %v874
          %1014 = vmatpush.bf16.msra.mxu0 %v858
          %1015 = vmatpush.bf16.msra.mxu0 %v842
          %1016 = vmatmul.bf16.gmra.mxu0 %v1006
          %v1017 = vpop.f32.mrf.mxu0
          %v1018 = vadd.f32 %v972, %v1017
          %v1019 = vpop.f32.mrf.mxu0
          %1020 = vdwg.mxu0
          %1021 = vmatpush.bf16.msra.mxu0 0
          %1022 = vmatpush.bf16.msra.mxu0 0
          %1023 = vmatpush.bf16.msra.mxu0 0
          %1024 = vmatpush.bf16.msra.mxu0 0
          %1025 = vmatpush.bf16.msra.mxu0 %v891
          %1026 = vmatpush.bf16.msra.mxu0 %v875
          %1027 = vmatpush.bf16.msra.mxu0 %v859
          %1028 = vmatpush.bf16.msra.mxu0 %v843
          %1029 = vmatmul.bf16.gmra.mxu0 %v1006
          %v1030 = vpop.f32.mrf.mxu0
          %v1031 = vadd.f32 %v973, %v1030
          %v1032 = vpop.f32.mrf.mxu0
          %1033 = vdwg.mxu0
          %1034 = vmatpush.bf16.msra.mxu0 0
          %1035 = vmatpush.bf16.msra.mxu0 0
          %1036 = vmatpush.bf16.msra.mxu0 0
          %1037 = vmatpush.bf16.msra.mxu0 0
          %1038 = vmatpush.bf16.msra.mxu0 %v892
          %1039 = vmatpush.bf16.msra.mxu0 %v876
          %1040 = vmatpush.bf16.msra.mxu0 %v860
          %1041 = vmatpush.bf16.msra.mxu0 %v844
          %1042 = vmatmul.bf16.gmra.mxu0 %v1006
          %v1043 = vpop.f32.mrf.mxu0
          %v1044 = vadd.f32 %v974, %v1043
          %v1045 = vpop.f32.mrf.mxu0
          %1046 = vdwg.mxu0
          %1047 = vmatpush.bf16.msra.mxu0 0
          %1048 = vmatpush.bf16.msra.mxu0 0
          %1049 = vmatpush.bf16.msra.mxu0 0
          %1050 = vmatpush.bf16.msra.mxu0 0
          %1051 = vmatpush.bf16.msra.mxu0 %v893
          %1052 = vmatpush.bf16.msra.mxu0 %v877
          %1053 = vmatpush.bf16.msra.mxu0 %v861
          %1054 = vmatpush.bf16.msra.mxu0 %v845
          %1055 = vmatmul.bf16.gmra.mxu0 %v1006
          %v1056 = vpop.f32.mrf.mxu0
          %v1057 = vadd.f32 %v975, %v1056
          %v1058 = vpop.f32.mrf.mxu0
          %1059 = vdwg.mxu0
          %1060 = vmatpush.bf16.msra.mxu0 0
          %1061 = vmatpush.bf16.msra.mxu0 0
          %1062 = vmatpush.bf16.msra.mxu0 0
          %1063 = vmatpush.bf16.msra.mxu0 0
          %1064 = vmatpush.bf16.msra.mxu0 %v894
          %1065 = vmatpush.bf16.msra.mxu0 %v878
          %1066 = vmatpush.bf16.msra.mxu0 %v862
          %1067 = vmatpush.bf16.msra.mxu0 %v846
          %1068 = vmatmul.bf16.gmra.mxu0 %v1006
          %v1069 = vpop.f32.mrf.mxu0
          %v1070 = vadd.f32 %v976, %v1069
          %v1071 = vpop.f32.mrf.mxu0
          %1072 = vdwg.mxu0
          %1073 = vmatpush.bf16.msra.mxu0 0
          %1074 = vmatpush.bf16.msra.mxu0 0
          %1075 = vmatpush.bf16.msra.mxu0 0
          %1076 = vmatpush.bf16.msra.mxu0 0
          %1077 = vmatpush.bf16.msra.mxu0 %v895
          %1078 = vmatpush.bf16.msra.mxu0 %v879
          %1079 = vmatpush.bf16.msra.mxu0 %v863
          %1080 = vmatpush.bf16.msra.mxu0 %v847
          %1081 = vmatmul.bf16.gmra.mxu0 %v1006
          %v1082 = vpop.f32.mrf.mxu0
          %v1083 = vadd.f32 %v977, %v1082
          %v1084 = vpop.f32.mrf.mxu0
          %1085 = vdwg.mxu0
          %1086 = vmatpush.bf16.msra.mxu0 0
          %1087 = vmatpush.bf16.msra.mxu0 0
          %1088 = vmatpush.bf16.msra.mxu0 0
          %1089 = vmatpush.bf16.msra.mxu0 0
          %1090 = vmatpush.bf16.msra.mxu0 %v896
          %1091 = vmatpush.bf16.msra.mxu0 %v880
          %1092 = vmatpush.bf16.msra.mxu0 %v864
          %1093 = vmatpush.bf16.msra.mxu0 %v848
          %1094 = vmatmul.bf16.gmra.mxu0 %v1006
          %v1095 = vpop.f32.mrf.mxu0
          %v1096 = vadd.f32 %v978, %v1095
          %v1097 = vpop.f32.mrf.mxu0
          %1098 = vdwg.mxu0
          %1099 = vmatpush.bf16.msra.mxu0 0
          %1100 = vmatpush.bf16.msra.mxu0 0
          %1101 = vmatpush.bf16.msra.mxu0 0
          %1102 = vmatpush.bf16.msra.mxu0 0
          %1103 = vmatpush.bf16.msra.mxu0 %v897
          %1104 = vmatpush.bf16.msra.mxu0 %v881
          %1105 = vmatpush.bf16.msra.mxu0 %v865
          %1106 = vmatpush.bf16.msra.mxu0 %v849
          %1107 = vmatmul.bf16.gmra.mxu0 %v1006
          %v1108 = vpop.f32.mrf.mxu0
          %v1109 = vadd.f32 %v979, %v1108
          %v1110 = vpop.f32.mrf.mxu0
          %1111 = vdwg.mxu0
          %1112 = vmatpush.bf16.msra.mxu0 0
          %1113 = vmatpush.bf16.msra.mxu0 0
          %1114 = vmatpush.bf16.msra.mxu0 0
          %1115 = vmatpush.bf16.msra.mxu0 0
          %1116 = vmatpush.bf16.msra.mxu0 %v898
          %1117 = vmatpush.bf16.msra.mxu0 %v882
          %1118 = vmatpush.bf16.msra.mxu0 %v866
          %1119 = vmatpush.bf16.msra.mxu0 %v850
          %1120 = vmatmul.bf16.gmra.mxu0 %v1006
          %v1121 = vpop.f32.mrf.mxu0
          %v1122 = vadd.f32 %v980, %v1121
          %v1123 = vpop.f32.mrf.mxu0
          %1124 = vdwg.mxu0
          %1125 = vmatpush.bf16.msra.mxu0 0
          %1126 = vmatpush.bf16.msra.mxu0 0
          %1127 = vmatpush.bf16.msra.mxu0 0
          %1128 = vmatpush.bf16.msra.mxu0 0
          %1129 = vmatpush.bf16.msra.mxu0 %v899
          %1130 = vmatpush.bf16.msra.mxu0 %v883
          %1131 = vmatpush.bf16.msra.mxu0 %v867
          %1132 = vmatpush.bf16.msra.mxu0 %v851
          %1133 = vmatmul.bf16.gmra.mxu0 %v1006
          %v1134 = vpop.f32.mrf.mxu0
          %v1135 = vadd.f32 %v981, %v1134
          %v1136 = vpop.f32.mrf.mxu0
          %1137 = vdwg.mxu0
          %1138 = vmatpush.bf16.msra.mxu0 0
          %1139 = vmatpush.bf16.msra.mxu0 0
          %1140 = vmatpush.bf16.msra.mxu0 0
          %1141 = vmatpush.bf16.msra.mxu0 0
          %1142 = vmatpush.bf16.msra.mxu0 %v900
          %1143 = vmatpush.bf16.msra.mxu0 %v884
          %1144 = vmatpush.bf16.msra.mxu0 %v868
          %1145 = vmatpush.bf16.msra.mxu0 %v852
          %1146 = vmatmul.bf16.gmra.mxu0 %v1006
          %v1147 = vpop.f32.mrf.mxu0
          %v1148 = vadd.f32 %v982, %v1147
          %v1149 = vpop.f32.mrf.mxu0
          %1150 = vdwg.mxu0
          %1151 = vmatpush.bf16.msra.mxu0 0
          %1152 = vmatpush.bf16.msra.mxu0 0
          %1153 = vmatpush.bf16.msra.mxu0 0
          %1154 = vmatpush.bf16.msra.mxu0 0
          %1155 = vmatpush.bf16.msra.mxu0 %v901
          %1156 = vmatpush.bf16.msra.mxu0 %v885
          %1157 = vmatpush.bf16.msra.mxu0 %v869
          %1158 = vmatpush.bf16.msra.mxu0 %v853
          %1159 = vmatmul.bf16.gmra.mxu0 %v1006
          %v1160 = vpop.f32.mrf.mxu0
          %v1161 = vadd.f32 %v983, %v1160
          %v1162 = vpop.f32.mrf.mxu0
          %1163 = vdwg.mxu0
          %1164 = vmatpush.bf16.msra.mxu0 0
          %1165 = vmatpush.bf16.msra.mxu0 0
          %1166 = vmatpush.bf16.msra.mxu0 0
          %1167 = vmatpush.bf16.msra.mxu0 0
          %1168 = vmatpush.bf16.msra.mxu0 %v902
          %1169 = vmatpush.bf16.msra.mxu0 %v886
          %1170 = vmatpush.bf16.msra.mxu0 %v870
          %1171 = vmatpush.bf16.msra.mxu0 %v854
          %1172 = vmatmul.bf16.gmra.mxu0 %v1006
          %v1173 = vpop.f32.mrf.mxu0
          %v1174 = vadd.f32 %v984, %v1173
          %v1175 = vpop.f32.mrf.mxu0
          %1176 = vdwg.mxu0
          %1177 = vmatpush.bf16.msra.mxu0 0
          %1178 = vmatpush.bf16.msra.mxu0 0
          %1179 = vmatpush.bf16.msra.mxu0 0
          %1180 = vmatpush.bf16.msra.mxu0 0
          %1181 = vmatpush.bf16.msra.mxu0 %v903
          %1182 = vmatpush.bf16.msra.mxu0 %v887
          %1183 = vmatpush.bf16.msra.mxu0 %v871
          %1184 = vmatpush.bf16.msra.mxu0 %v855
          %1185 = vmatmul.bf16.gmra.mxu0 %v1006
          %v1186 = vpop.f32.mrf.mxu0
          %v1187 = vadd.f32 %v985, %v1186
          %v1188 = vpop.f32.mrf.mxu0
          %1189 = vdwg.mxu0
          %1190 = vmatpush.bf16.msra.mxu0 0
          %1191 = vmatpush.bf16.msra.mxu0 0
          %1192 = vmatpush.bf16.msra.mxu0 0
          %1193 = vmatpush.bf16.msra.mxu0 0
          %1194 = vmatpush.bf16.msra.mxu0 %v904
          %1195 = vmatpush.bf16.msra.mxu0 %v888
          %1196 = vmatpush.bf16.msra.mxu0 %v872
          %1197 = vmatpush.bf16.msra.mxu0 %v856
          %1198 = vmatmul.bf16.gmra.mxu0 %v1006
          %v1199 = vpop.f32.mrf.mxu0
          %v1200 = vadd.f32 %v986, %v1199
          %v1201 = vpop.f32.mrf.mxu0
          %1202 = vdwg.mxu0
          %1203 = vmatpush.bf16.msra.mxu0 0
          %1204 = vmatpush.bf16.msra.mxu0 0
          %1205 = vmatpush.bf16.msra.mxu0 0
          %1206 = vmatpush.bf16.msra.mxu0 0
          %1207 = vmatpush.bf16.msra.mxu0 %v905
          %1208 = vmatpush.bf16.msra.mxu0 %v889
          %1209 = vmatpush.bf16.msra.mxu0 %v873
          %1210 = vmatpush.bf16.msra.mxu0 %v857
          %1211 = vmatmul.bf16.gmra.mxu0 %v1006
          %v1212 = vpop.f32.mrf.mxu0
          %v1213 = vadd.f32 %v987, %v1212
          %v1214 = vpop.f32.mrf.mxu0
          %1215 = vdwg.mxu0
          %v1216 = vpack.c.bf16 %v1031, %v1018
          %v1217 = vpack.c.bf16 %v1057, %v1044
          %v1218 = vpack.c.bf16 %v1083, %v1070
          %v1219 = vpack.c.bf16 %v1109, %v1096
          %v1220 = vpack.c.bf16 %v1135, %v1122
          %v1221 = vpack.c.bf16 %v1161, %v1148
          %v1222 = vpack.c.bf16 %v1187, %v1174
          %v1223 = vpack.c.bf16 %v1213, %v1200
          %v1232 = vrot.slane %v1216, 3
          %v1233 = vrot.slane %v1217, 6
          %v1234 = vrot.slane %v1217, 1
          %v1235 = vrot.slane %v1218, 4
          %v1236 = vrot.slane %v1218, 7
          %v1237 = vrot.slane %v1219, 2
          %v1238 = vrot.slane %v1219, 5
          %v1239 = vrot.slane %v1220, 3
          %v1240 = vrot.slane %v1221, 6
          %v1241 = vrot.slane %v1221, 1
          %v1242 = vrot.slane %v1222, 4
          %v1243 = vrot.slane %v1222, 7
          %v1244 = vrot.slane %v1223, 2
          %v1245 = vrot.slane %v1223, 5
          %v1248 = vsel %vm454, %v1216, %v1232
          %vm1249 = vcmask 1042434
          %v1252 = vsel %vm1249, %v1233, %v1234
          %v1253 = vsel %vm455, %v1248, %v1252
          %vm1254 = vcmask 1044484
          %v1257 = vsel %vm1254, %v1235, %v1236
          %vm1258 = vcmask 1046534
          %v1261 = vsel %vm1258, %v1237, %v1238
          %vm1262 = vcmask 1045508
          %v1263 = vsel %vm1262, %v1257, %v1261
          %vm1264 = vcmask 1043456
          %v1265 = vsel %vm1264, %v1253, %v1263
          %v1268 = vsel %vm454, %v1220, %v1239
          %v1271 = vsel %vm1249, %v1240, %v1241
          %v1272 = vsel %vm455, %v1268, %v1271
          %v1275 = vsel %vm1254, %v1242, %v1243
          %v1278 = vsel %vm1258, %v1244, %v1245
          %v1279 = vsel %vm1262, %v1275, %v1278
          %v1280 = vsel %vm1264, %v1272, %v1279
          %vm1283 = vcmask 1040384
          %vm1284 = vsmask.f32 256
          %vm1285 = vmand %vm1283, %vm1284
          %vm1286 = vcmask 1041409
          %vm1287 = vsmask.f32 1280
          %vm1288 = vmand %vm1286, %vm1287
          %vm1289 = vmor %vm1288, %vm1285
          %vm1290 = vcmask 1042434
          %vm1291 = vsmask.f32 2304
          %vm1292 = vmand %vm1290, %vm1291
          %vm1293 = vmor %vm1292, %vm1289
          %vm1294 = vcmask 1043459
          %vm1295 = vsmask.f32 3328
          %vm1296 = vmand %vm1294, %vm1295
          %vm1297 = vmor %vm1296, %vm1293
          %vm1298 = vcmask 1044484
          %vm1299 = vsmask.f32 4352
          %vm1300 = vmand %vm1298, %vm1299
          %vm1301 = vmor %vm1300, %vm1297
          %vm1302 = vcmask 1045509
          %vm1303 = vsmask.f32 5376
          %vm1304 = vmand %vm1302, %vm1303
          %vm1305 = vmor %vm1304, %vm1301
          %vm1306 = vcmask 1046534
          %vm1307 = vsmask.f32 6400
          %vm1308 = vmand %vm1306, %vm1307
          %vm1309 = vmor %vm1308, %vm1305
          %vm1310 = vcmask 1047559
          %vm1311 = vsmask.f32 7424
          %vm1312 = vmand %vm1310, %vm1311
          %vm1313 = vmor %vm1312, %vm1309
          %v1314 = vld [vmem:[%s310] sm:$0xff]
          %v1315 = vsel %vm1313, %v1265, %v1314
          %1316 = vst [vmem:[%s310] sm:$0xff] %v1315
          %v1317 = vld [vmem:[%s310 + $0x8] sm:$0xff]
          %v1318 = vsel %vm1313, %v1280, %v1317
          %1319 = vst [vmem:[%s310 + $0x8] sm:$0xff] %v1318
        $region64: #{tpu_custom_call.1} parent=39 // pred_fallthru
          _
        %p1320 = scmp.lt.s32.totalorder %s25, 1
        %s1321 = scalar_select %p1320, %s25, 1
        %s1322 = smul.addr %s1321, 16
        %s1323 = scalar_lea.vmem %s5, %s1322
        // Predicated region
        $region65: #{tpu_custom_call.1} parent=39 // pred_check
          %p1324 = pneg %p163
        $region66: #{tpu_custom_call.1} parent=39 // pred_check_branch
          %1326 = sbr.rel (%p1324) target = $region68
        $region67: #{tpu_custom_call.1} parent=39 // pred_region
          _
        $region68: #{tpu_custom_call.1} parent=39 // pred_fallthru
          _
      $region40: #{tpu_custom_call.1} parent=5 // pred_fallthru
        _
      %p1327 = scmp.le.s32.totalorder 2, %s16
      // Predicated region
      $region69: #{tpu_custom_call.1} parent=5 // pred_check
        %p1328 = pneg %p1327
      $region70: #{tpu_custom_call.1} parent=5 // pred_check_branch
        %1330 = sbr.rel (%p1328) target = $region72
      $region71: #{tpu_custom_call.1} parent=5 // pred_region
        %s1331 = ssub.s32 %s16, 2
        // Predicated region
        $region73: #{tpu_custom_call.1} parent=71 // pred_check
          %p1332 = pneg %p169
        $region74: #{tpu_custom_call.1} parent=71 // pred_check_branch
          %1334 = sbr.rel (%p1332) target = $region76
        $region75: #{tpu_custom_call.1} parent=71 // pred_region
          %p1335 = scmp.lt.s32.totalorder %s27, 1
          %s1336 = scalar_select %p1335, %s27, 1
          %s1337 = smul.addr %s1336, 16
          %s1338 = scalar_lea.vmem %s5, %s1337
        $region76: #{tpu_custom_call.1} parent=71 // pred_fallthru
          _
      $region72: #{tpu_custom_call.1} parent=5 // pred_fallthru
        _
    $region6: #{tpu_custom_call.1} parent=1 // loop_footer
      %s20 = sadd.s32 1, %s16
    $region7: #{tpu_custom_call.1} parent=1 // loop_footer_branch
      %15 = sbr.rel target = $region3
    $region8: #{tpu_custom_call.1} parent=1 // loop_exit
      _
    %1339 = vsyncpa [#allocation4], 1
    %s1340 = scalar_lea.sflag [#allocation4], 1
    %1341 = vsyncpa %s1340, 1
    %1342 = vsyncpa [#allocation6], 1
    %1343 = vsyncpa [#allocation9], 1

</llo_original>
